<compile_context>
chip_gen: v7x
topology: tpu7x:2x2x1
jax: 0.10.0
libtpu: 0.0.40
codegen_flags: <defaults>
</compile_context>

<pallas_src>
import jax
import jax.numpy as jnp
from jax.experimental import pallas as pl
from jax.experimental.pallas import tpu as pltpu


def _maxout_kernel(*refs):
    # refs = (x_piece_0, ..., x_piece_{k-1}, out); all blocks are (TG, TL).
    *x_refs, o_ref = refs
    acc = x_refs[0][...]
    for r in x_refs[1:]:
        acc = jnp.maximum(acc, r[...])
    o_ref[...] = acc


def _round_up(a: int, m: int) -> int:
    return ((a + m - 1) // m) * m


def _sublane_multiple(dtype) -> int:
    itemsize = jnp.dtype(dtype).itemsize
    return {4: 8, 2: 16, 1: 32}.get(itemsize, 8)


def _choose_tiles(G: int, HWp: int, k: int, dtype):
    """Pick (TG, TL) so 2*(k inputs + 1 output)*TG*TL*bytes stays under budget."""
    bytes_per = jnp.dtype(dtype).itemsize
    sub = _sublane_multiple(dtype)
    budget = 24 * 1024 * 1024  # double-buffered working-set budget (v7x-safe)
    max_elems = max(budget // (2 * (k + 1) * bytes_per), 8 * 128)

    # Lane tile: largest multiple of 128 that divides HWp, within budget/cap.
    tl_cap = max(128, min(HWp, 4096, max_elems // sub))
    TL = 128
    t = 128
    while t <= tl_cap:
        if HWp % t == 0:
            TL = t
        t += 128

    # Sublane (G) tile: multiple of the dtype's sublane packing, or the full dim.
    tg_cap = max(sub, min(1024, max_elems // TL))
    if G <= tg_cap:
        TG = G  # block equals the full array dim -> always legal
    else:
        TG = (tg_cap // sub) * sub
    return TG, TL


def maxout(x: jax.Array, num_pieces: int) -> jax.Array:
    """Pallas implementation of Maxout.forward for NCHW inputs."""
    N, C, H, W = x.shape
    k = num_pieces
    assert C % k == 0
    Cg = C // k
    G = N * Cg
    HW = H * W
    HWp = _round_up(HW, 128)

    # Contiguous NCHW memory order gives the (G, k, HW) view for free; pad the
    # lane axis to a multiple of 128 only if needed (padded lanes are dropped).
    if HWp != HW:
        x_r = x.reshape(G, k, HW)
        x_r = jnp.pad(x_r, ((0, 0), (0, 0), (0, HWp - HW)))
        x2 = x_r.reshape(G, k * HWp)
    else:
        x2 = x.reshape(G, k * HWp)

    TG, TL = _choose_tiles(G, HWp, k, x.dtype)
    blocks_per_piece = HWp // TL
    grid = (pl.cdiv(G, TG), blocks_per_piece)

    def piece_spec(p):
        # Block index along the lane axis selects piece p's window.
        return pl.BlockSpec(
            (TG, TL), lambda gi, j, p=p: (gi, p * blocks_per_piece + j)
        )

    bytes_per = jnp.dtype(x.dtype).itemsize
    cost = pl.CostEstimate(
        flops=G * HW * max(k - 1, 0),
        transcendentals=0,
        bytes_accessed=(k + 1) * G * HW * bytes_per,
    )

    out = pl.pallas_call(
        _maxout_kernel,
        out_shape=jax.ShapeDtypeStruct((G, HWp), x.dtype),
        grid=grid,
        in_specs=[piece_spec(p) for p in range(k)],
        out_specs=pl.BlockSpec((TG, TL), lambda gi, j: (gi, j)),
        compiler_params=pltpu.CompilerParams(
            dimension_semantics=("parallel", "parallel"),
            vmem_limit_bytes=48 * 1024 * 1024,
        ),
        cost_estimate=cost,
    )(*([x2] * k))

    if HWp != HW:
        out = out[:, :HW]
    return out.reshape(N, Cg, H, W)


def maxout_ref(x: jax.Array, num_pieces: int) -> jax.Array:
    """Pure-JAX reference matching the PyTorch semantics."""
    N, C, H, W = x.shape
    r = x.reshape(N, C // num_pieces, num_pieces, H, W)
    return jnp.max(r, axis=2)


if __name__ == "__main__":
    key = jax.random.PRNGKey(0)

    # Primary test: NCHW input, C divisible by num_pieces, HW multiple of 128.
    num_pieces = 2
    x = jax.random.normal(key, (2, 4, 16, 16), dtype=jnp.float32)
    out = jax.block_until_ready(maxout(x, num_pieces))
    ref = maxout_ref(x, num_pieces)
    assert out.shape == (2, 2, 16, 16), out.shape
    assert jnp.allclose(out, ref), "Pallas maxout mismatch vs reference"

    # Secondary test: HW not a multiple of 128 (exercises the lane-pad path).
    x2 = jax.random.normal(jax.random.PRNGKey(1), (2, 6, 7, 9), dtype=jnp.float32)
    out2 = jax.block_until_ready(maxout(x2, 3))
    ref2 = maxout_ref(x2, 3)
    assert out2.shape == (2, 2, 7, 9), out2.shape
    assert jnp.allclose(out2, ref2), "Pallas maxout mismatch vs reference (padded)"

    print("KERNEL_OK")
</pallas_src>

<mosaic_0001>
module attributes {stable_mosaic.version = 11 : i64} {
  func.func @_maxout_kernel(%arg0: i32, %arg1: i32, %arg2: memref<4x256xf32, #tpu.memory_space<vmem>>, %arg3: memref<4x256xf32, #tpu.memory_space<vmem>>, %arg4: memref<4x256xf32, #tpu.memory_space<vmem>>) attributes {dimension_semantics = [#tpu.dimension_semantics<parallel>, #tpu.dimension_semantics<parallel>], iteration_bounds = array<i64: 1, 1>, scalar_prefetch = 0 : i64, scratch_operands = 0 : i64, tpu.core_type = #tpu.core_type<tc>, window_params = [{transform_indices = @transform_0, window_bounds = array<i64: 4, 256>}, {transform_indices = @transform_1, window_bounds = array<i64: 4, 256>}, {transform_indices = @transform_2, window_bounds = array<i64: 4, 256>}]} {
    %c0 = arith.constant 0 : index
    %c0_0 = arith.constant 0 : index
    %0 = vector.load %arg2[%c0, %c0_0] : memref<4x256xf32, #tpu.memory_space<vmem>>, vector<4x256xf32>
    %c0_1 = arith.constant 0 : index
    %c0_2 = arith.constant 0 : index
    %1 = vector.load %arg3[%c0_1, %c0_2] : memref<4x256xf32, #tpu.memory_space<vmem>>, vector<4x256xf32>
    %2 = arith.maximumf %0, %1 : vector<4x256xf32>
    %c0_3 = arith.constant 0 : index
    %c0_4 = arith.constant 0 : index
    %3 = vector.load %arg4[%c0_3, %c0_4] : memref<4x256xf32, #tpu.memory_space<vmem>>, vector<4x256xf32>
    tpu.vector_store %arg4[%c0_3, %c0_4], %2 {strides = array<i32>} : memref<4x256xf32, #tpu.memory_space<vmem>>, vector<4x256xf32>,
    return
  }
  func.func @transform_0(%arg0: i32, %arg1: i32) -> (i32, i32) {
    %c0_i32 = arith.constant 0 : i32
    %0 = arith.addi %c0_i32, %arg1 : i32
    %c0_i32_0 = arith.constant 0 : i32
    return %arg0, %0 : i32, i32
  }
  func.func @transform_1(%arg0: i32, %arg1: i32) -> (i32, i32) {
    %c1_i32 = arith.constant 1 : i32
    %0 = arith.addi %c1_i32, %arg1 : i32
    %c0_i32 = arith.constant 0 : i32
    return %arg0, %0 : i32, i32
  }
  func.func @transform_2(%arg0: i32, %arg1: i32) -> (i32, i32) {
    %c0_i32 = arith.constant 0 : i32
    return %arg0, %arg1 : i32, i32
  }
}

</mosaic_0001>

<llo_original>
// kernel: tpu_custom_call.1
$region0: #{tpu_custom_call.1}
  #allocation0 [shape = 'u32[]', space=smem, size = 0x4, offset = 0x4, fixed_abs, tag = 'smem constant byte address 0x4 - core index']
  #allocation1 [shape = 'u32[144,128]{1,0:T(1,128)}', space=vmem, size = 0x12000, scoped, tag = 'internal scratch']
  %s0 = inlined_call_operand.hbm [shape: f32[4,512], index: 0, kind: input, shape index: {}]
  %s1 = inlined_call_operand.hbm [shape: f32[4,512], index: 1, kind: input, shape index: {}]
  %s2 = inlined_call_operand.hbm [shape: f32[4,256], index: 2, kind: output, shape index: {}]
  %s3 = sld [smem:[#allocation0]]
  $region26: #{tpu_custom_call.1} parent=0
    _
  %s5 = ssub.s32 1, %s3
  %s6 = scalar_select 0, %s5, %s3
  $region1: #{tpu_custom_call.1} parent=0
    #allocation2 [shape = 'u8[4096]{0}', space=vmem, size = 0x1000, scoped, tag = 'input window, operand 0, single buffered']
    #allocation3 [shape = 's32[1]{0}', space=sflag, size = 0x4, scoped, tag = 'scoped memory for tpu_custom_call.1']
    #allocation4 [shape = 's32[1]{0}', space=sflag, size = 0x4, scoped, tag = 'scoped memory for tpu_custom_call.1']
    #allocation5 [shape = 'u8[4096]{0}', space=vmem, size = 0x1000, scoped, tag = 'input window, operand 1, single buffered']
    #allocation6 [shape = 's32[1]{0}', space=sflag, size = 0x4, scoped, tag = 'scoped memory for tpu_custom_call.1']
    #allocation7 [shape = 'u8[4096]{0}', space=vmem, size = 0x1000, scoped, tag = 'output window, operand 0, single buffered']
    %7 = vsyncpa [#allocation3], 0
    %8 = vsyncpa [#allocation6], 0
    %9 = vsyncpa [#allocation4], 0
    // Predicated region
    $region2: #{tpu_custom_call.1} parent=1 // pred_check
      _
    $region3: #{tpu_custom_call.1} parent=1 // pred_check_branch
      %11 = sbr.rel (0) target = $region5
    $region4: #{tpu_custom_call.1} parent=1 // pred_region
      %s13 = ssub.s32 128, 128
      %14 = vsyncadd [#allocation3], %s13
      %s16 = sshll.u32 [#allocation2], 4
      %s17 = int_to_ptr.vmem [resolvable:$true] %s16
      %19 = dma.hbm_to_vmem [thread:$0]  %s0, 128, %s17, [#allocation3]
    $region5: #{tpu_custom_call.1} parent=1 // pred_fallthru
      _
    // Predicated region
    $region6: #{tpu_custom_call.1} parent=1 // pred_check
      _
    $region7: #{tpu_custom_call.1} parent=1 // pred_check_branch
      %21 = sbr.rel (0) target = $region9
    $region8: #{tpu_custom_call.1} parent=1 // pred_region
      %s22 = sadd.s32 0, 1
      %s23 = smul.u32 2, %s22
      %s25 = ssub.s32 128, 128
      %26 = vsyncadd [#allocation6], %s25
      %s27 = smul.addr %s23, 64
      %s28 = scalar_lea.hbm %s1, %s27
      %s30 = sshll.u32 [#allocation5], 4
      %s31 = int_to_ptr.vmem [resolvable:$true] %s30
      %33 = dma.hbm_to_vmem [thread:$0]  %s28, 128, %s31, [#allocation6]
    $region9: #{tpu_custom_call.1} parent=1 // pred_fallthru
      _
    // Predicated region
    $region10: #{tpu_custom_call.1} parent=1 // pred_check
      _
    $region11: #{tpu_custom_call.1} parent=1 // pred_check_branch
      %35 = sbr.rel (0) target = $region13
    $region12: #{tpu_custom_call.1} parent=1 // pred_region
      %36 = dma.done [#allocation3], 128
    $region13: #{tpu_custom_call.1} parent=1 // pred_fallthru
      _
    // Predicated region
    $region14: #{tpu_custom_call.1} parent=1 // pred_check
      _
    $region15: #{tpu_custom_call.1} parent=1 // pred_check_branch
      %38 = sbr.rel (0) target = $region17
    $region16: #{tpu_custom_call.1} parent=1 // pred_region
      %39 = dma.done [#allocation6], 128
    $region17: #{tpu_custom_call.1} parent=1 // pred_fallthru
      _
    %s40 = sadd.s32 0, 1
    %s41 = smul.u32 2, %s40
    %v42 = vld [vmem:[#allocation2] sm:$0xff]
    %v43 = vld [vmem:[#allocation5] sm:$0xff]
    %v44 = vmax.f32 %v42, %v43
    %45 = vst [vmem:[#allocation7] sm:$0xff] %v44
    // Predicated region
    $region18: #{tpu_custom_call.1} parent=1 // pred_check
      _
    $region19: #{tpu_custom_call.1} parent=1 // pred_check_branch
      %47 = sbr.rel (0) target = $region21
    $region20: #{tpu_custom_call.1} parent=1 // pred_region
      %s49 = ssub.s32 128, 128
      %50 = vsyncadd [#allocation4], %s49
      %s52 = sshll.u32 [#allocation7], 4
      %s53 = int_to_ptr.vmem [resolvable:$true] %s52
      %55 = dma.vmem_to_hbm [thread:$0]  %s53, 128, %s2, [#allocation4]
    $region21: #{tpu_custom_call.1} parent=1 // pred_fallthru
      _
    // Predicated region
    $region22: #{tpu_custom_call.1} parent=1 // pred_check
      _
    $region23: #{tpu_custom_call.1} parent=1 // pred_check_branch
      %57 = sbr.rel (0) target = $region25
    $region24: #{tpu_custom_call.1} parent=1 // pred_region
      %58 = dma.done [#allocation4], 128
    $region25: #{tpu_custom_call.1} parent=1 // pred_fallthru
      _
    %59 = vsyncpa [#allocation3], 1
    %60 = vsyncpa [#allocation6], 1
    %61 = vsyncpa [#allocation4], 1

</llo_original>
